<compile_context>
chip_gen: v7x
topology: tpu7x:2x2x1
jax: 0.10.0
libtpu: 0.0.40
codegen_flags: <defaults>
</compile_context>

<pallas_src>
import jax
import jax.numpy as jnp
from jax import lax
from jax.experimental import pallas as pl
from jax.experimental.pallas import tpu as pltpu


def _gelu_exact(x):
    # PyTorch nn.GELU() default = exact erf-based GELU.
    return 0.5 * x * (1.0 + lax.erf(x / jnp.sqrt(2.0).astype(x.dtype)))


def build_banded_weight(w_hwio, W):
    """Fold a 3x3 'same' (padding=1) conv weight into per-vertical-tap banded blocks.

    Returns B of shape (3, W*Cin, W*Cout) such that, with x the (rows, W*Cin)
    row-slab, z_kh = x @ B[kh] gives the partial conv output of vertical tap kh
    for every row; the horizontal halo (w-1+kw outside [0, W)) is folded into
    the band structure (out-of-range taps simply omitted = zero padding).
    """
    KH, KW, Cin, Cout = w_hwio.shape
    # sel[kw, p, w] = 1 iff input column p feeds output column w through tap kw
    # (p = w - 1 + kw); jnp.eye drops the out-of-range taps automatically.
    sel = jnp.stack([jnp.eye(W, dtype=w_hwio.dtype, k=1 - kw) for kw in range(KW)])
    blocks = [
        jnp.einsum("kpw,kio->piwo", sel, w_hwio[kh]).reshape(W * Cin, W * Cout)
        for kh in range(KH)
    ]
    return jnp.stack(blocks, axis=0)  # (KH, W*Cin, W*Cout)


def fold_bn(gamma, beta, running_mean, running_var, eps=1e-5):
    scale = gamma / jnp.sqrt(running_var + eps)
    bias = beta - running_mean * scale
    return scale, bias


def _pick_rows_tile(N, H, rows_target=256):
    """Largest Nb dividing N with Nb*H <= rows_target (MXU-row occupancy)."""
    nb = max(1, min(N, max(1, rows_target // max(H, 1))))
    while N % nb:
        nb -= 1
    if (nb * H) % 8:
        # Keep the block's sublane dim tile-aligned; full-array block is always
        # legal.  TODO(synk): H-strip tiling instead when N*H is huge.
        nb = N
    return nb


def _double_conv_kernel(x_ref, mup_ref, mdn_ref, b1_ref, t1_ref, b2_ref, t2_ref,
                        o_ref):
    """Fused (conv3x3 + folded-BN + GELU) x2 on a stacked row-slab block.

    x_ref:           (M, W*Cin)  stacked rows of Nb images, matmul dtype
    mup_ref/mdn_ref: (M, 1) f32  0 on each image's first/last row, else 1
    b1_ref, b2_ref:  (3, W*Cin, W*Cmid), (3, W*Cmid, W*Cout) banded weights
                     (BN scale pre-folded into columns), matmul dtype
    t1_ref, t2_ref:  (1, W*C) folded-BN bias, f32
    o_ref:           (M, W*Cout) lane-dense output slab
    """
    m_up = mup_ref[...]
    m_dn = mdn_ref[...]
    m = x_ref.shape[0]

    def stage(lhs, b_ref, t_ref):
        # Three dots share one LHS (one per vertical tap); f32 accumulation.
        z0 = jnp.dot(lhs, b_ref[0], preferred_element_type=jnp.float32)  # tap h-1
        z1 = jnp.dot(lhs, b_ref[1], preferred_element_type=jnp.float32)  # tap h
        z2 = jnp.dot(lhs, b_ref[2], preferred_element_type=jnp.float32)  # tap h+1
        # Vertical halo: shift the f32 tap outputs with XLU rolls; zero rows
        # whose shifted tap would cross an image boundary (= 'SAME' zero rows).
        y = (pltpu.roll(z0, 1, axis=0) * m_up
             + z1
             + pltpu.roll(z2, m - 1, axis=0) * m_dn)
        # Folded-BN bias (scale already in the weights) + exact GELU, in f32.
        return _gelu_exact(y + t_ref[...])

    mm_dtype = b1_ref.dtype
    y1 = stage(x_ref[...], b1_ref, t1_ref)            # (M, W*Cmid), stays on-chip
    y2 = stage(y1.astype(mm_dtype), b2_ref, t2_ref)   # (M, W*Cout)
    o_ref[...] = y2.astype(o_ref.dtype)               # lane-dense store


def double_conv_forward(x_nchw, params, matmul_dtype=jnp.bfloat16):
    """Matches DoubleConv.forward (inference BN): input/output are NCHW.

    matmul_dtype=jnp.bfloat16 (default) uses the bf16-native MXU path with f32
    accumulation; jnp.float32 keeps strict numerical parity with the reference.
    """
    N, Cin, H, W = x_nchw.shape
    w1, w2 = params["w1"], params["w2"]
    Cmid, Cout = w1.shape[-1], w2.shape[-1]

    Nb = _pick_rows_tile(N, H)
    M = Nb * H

    # NCHW -> NHWC -> stacked row-slab (N*H, W*C): channels lane-minor, rows of
    # Nb images per block stacked into the matmul M dimension.
    x2d = jnp.transpose(x_nchw, (0, 2, 3, 1)).reshape(N * H, W * Cin)
    x2d = x2d.astype(matmul_dtype)  # halves activation DMA bytes when bf16

    # Fold BN scale into the banded-weight columns (exact); bias stays separate.
    s1 = jnp.tile(params["scale1"].astype(jnp.float32), W)              # (W*Cmid,)
    s2 = jnp.tile(params["scale2"].astype(jnp.float32), W)              # (W*Cout,)
    t1 = jnp.tile(params["bias1"].astype(jnp.float32), W).reshape(1, W * Cmid)
    t2 = jnp.tile(params["bias2"].astype(jnp.float32), W).reshape(1, W * Cout)
    b1 = (build_banded_weight(w1, W) * s1[None, None, :]).astype(matmul_dtype)
    b2 = (build_banded_weight(w2, W) * s2[None, None, :]).astype(matmul_dtype)

    # Per-image vertical-halo masks (same for every grid step).
    rid = jnp.tile(jnp.arange(H, dtype=jnp.int32), Nb)
    m_up = (rid != 0).astype(jnp.float32).reshape(M, 1)
    m_dn = (rid != H - 1).astype(jnp.float32).reshape(M, 1)

    out2d = pl.pallas_call(
        _double_conv_kernel,
        out_shape=jax.ShapeDtypeStruct((N * H, W * Cout), x_nchw.dtype),
        grid=(N // Nb,),
        in_specs=[
            pl.BlockSpec((M, W * Cin), lambda n: (n, 0)),
            pl.BlockSpec((M, 1), lambda n: (0, 0)),
            pl.BlockSpec((M, 1), lambda n: (0, 0)),
            pl.BlockSpec((3, W * Cin, W * Cmid), lambda n: (0, 0, 0)),
            pl.BlockSpec((1, W * Cmid), lambda n: (0, 0)),
            pl.BlockSpec((3, W * Cmid, W * Cout), lambda n: (0, 0, 0)),
            pl.BlockSpec((1, W * Cout), lambda n: (0, 0)),
        ],
        out_specs=pl.BlockSpec((M, W * Cout), lambda n: (n, 0)),
        compiler_params=pltpu.CompilerParams(
            dimension_semantics=("parallel",)),
    )(x2d, m_up, m_dn, b1, t1, b2, t2)

    # slab -> NHWC -> NCHW (module boundary matches the PyTorch layout).
    return jnp.transpose(out2d.reshape(N, H, W, Cout), (0, 3, 1, 2))


# ---------------- pure-JAX reference (for correctness check) ----------------
def _ref_stage(x_nhwc, w_hwio, scale, bias):
    y = lax.conv_general_dilated(
        x_nhwc, w_hwio, window_strides=(1, 1), padding="SAME",
        dimension_numbers=("NHWC", "HWIO", "NHWC"))
    y = y * scale[None, None, None, :] + bias[None, None, None, :]
    return _gelu_exact(y)


def _ref_double_conv(x_nchw, params):
    x = jnp.transpose(x_nchw, (0, 2, 3, 1))
    y = _ref_stage(x, params["w1"], params["scale1"], params["bias1"])
    y = _ref_stage(y, params["w2"], params["scale2"], params["bias2"])
    return jnp.transpose(y, (0, 3, 1, 2))


if __name__ == "__main__":
    # Small shapes consistent with DoubleConv(in_channels=4, out_channels=8).
    N, Cin, H, W = 2, 4, 16, 16
    Cout = 8
    Cmid = Cout  # mid_channels defaults to out_channels

    key = jax.random.PRNGKey(0)
    ks = jax.random.split(key, 12)

    x = jax.random.normal(ks[0], (N, Cin, H, W), jnp.float32)

    # Deterministic parameter init (shapes per module __init__), weights in HWIO.
    w1 = 0.1 * jax.random.normal(ks[1], (3, 3, Cin, Cmid), jnp.float32)
    w2 = 0.1 * jax.random.normal(ks[2], (3, 3, Cmid, Cout), jnp.float32)

    gamma1 = 1.0 + 0.1 * jax.random.normal(ks[3], (Cmid,), jnp.float32)
    beta1 = 0.1 * jax.random.normal(ks[4], (Cmid,), jnp.float32)
    mean1 = 0.1 * jax.random.normal(ks[5], (Cmid,), jnp.float32)
    var1 = 0.5 + jnp.abs(jax.random.normal(ks[6], (Cmid,), jnp.float32))

    gamma2 = 1.0 + 0.1 * jax.random.normal(ks[7], (Cout,), jnp.float32)
    beta2 = 0.1 * jax.random.normal(ks[8], (Cout,), jnp.float32)
    mean2 = 0.1 * jax.random.normal(ks[9], (Cout,), jnp.float32)
    var2 = 0.5 + jnp.abs(jax.random.normal(ks[10], (Cout,), jnp.float32))

    scale1, bias1 = fold_bn(gamma1, beta1, mean1, var1)
    scale2, bias2 = fold_bn(gamma2, beta2, mean2, var2)

    params = dict(w1=w1, scale1=scale1, bias1=bias1,
                  w2=w2, scale2=scale2, bias2=bias2)

    fwd = jax.jit(double_conv_forward, static_argnames="matmul_dtype")
    ref = jax.block_until_ready(_ref_double_conv(x, params))

    # Strict-parity path (f32 MXU operands).
    out_f32 = jax.block_until_ready(fwd(x, params, matmul_dtype=jnp.float32))
    assert out_f32.shape == (N, Cout, H, W), out_f32.shape
    assert jnp.allclose(out_f32, ref, atol=1e-4, rtol=1e-4), \
        float(jnp.max(jnp.abs(out_f32 - ref)))

    # Default fast path (bf16 MXU operands, f32 accumulate / BN / GELU).
    out_bf16 = jax.block_until_ready(fwd(x, params))
    assert out_bf16.shape == (N, Cout, H, W), out_bf16.shape
    assert jnp.allclose(out_bf16, ref, atol=5e-2, rtol=5e-2), \
        float(jnp.max(jnp.abs(out_bf16 - ref)))

    print("KERNEL_OK")
</pallas_src>

<mosaic_0001>
module attributes {stable_mosaic.version = 11 : i64} {
  func.func @_double_conv_kernel(%arg0: i32, %arg1: memref<32x64xf32, #tpu.memory_space<vmem>>, %arg2: memref<32x1xf32, #tpu.memory_space<vmem>>, %arg3: memref<32x1xf32, #tpu.memory_space<vmem>>, %arg4: memref<3x64x128xf32, #tpu.memory_space<vmem>>, %arg5: memref<1x128xf32, #tpu.memory_space<vmem>>, %arg6: memref<3x128x128xf32, #tpu.memory_space<vmem>>, %arg7: memref<1x128xf32, #tpu.memory_space<vmem>>, %arg8: memref<32x128xf32, #tpu.memory_space<vmem>>) attributes {dimension_semantics = [#tpu.dimension_semantics<parallel>], iteration_bounds = array<i64: 1>, scalar_prefetch = 0 : i64, scratch_operands = 0 : i64, tpu.core_type = #tpu.core_type<tc>, window_params = [{transform_indices = @transform_0, window_bounds = array<i64: 32, 64>}, {pipeline_mode = #tpu.pipeline_mode<synchronous>, transform_indices = @transform_1, window_bounds = array<i64: 32, 1>}, {pipeline_mode = #tpu.pipeline_mode<synchronous>, transform_indices = @transform_2, window_bounds = array<i64: 32, 1>}, {pipeline_mode = #tpu.pipeline_mode<synchronous>, transform_indices = @transform_3, window_bounds = array<i64: 3, 64, 128>}, {pipeline_mode = #tpu.pipeline_mode<synchronous>, transform_indices = @transform_4, window_bounds = array<i64: 1, 128>}, {pipeline_mode = #tpu.pipeline_mode<synchronous>, transform_indices = @transform_5, window_bounds = array<i64: 3, 128, 128>}, {pipeline_mode = #tpu.pipeline_mode<synchronous>, transform_indices = @transform_6, window_bounds = array<i64: 1, 128>}, {transform_indices = @transform_7, window_bounds = array<i64: 32, 128>}]} {
    %c0 = arith.constant 0 : index
    %c0_0 = arith.constant 0 : index
    %0 = vector.load %arg2[%c0, %c0_0] : memref<32x1xf32, #tpu.memory_space<vmem>>, vector<32x1xf32>
    %c0_1 = arith.constant 0 : index
    %c0_2 = arith.constant 0 : index
    %1 = vector.load %arg3[%c0_1, %c0_2] : memref<32x1xf32, #tpu.memory_space<vmem>>, vector<32x1xf32>
    %c0_3 = arith.constant 0 : index
    %c0_4 = arith.constant 0 : index
    %2 = vector.load %arg1[%c0_3, %c0_4] : memref<32x64xf32, #tpu.memory_space<vmem>>, vector<32x64xf32>
    %c0_5 = arith.constant 0 : index
    %c0_6 = arith.constant 0 : index
    %c0_7 = arith.constant 0 : index
    %3 = vector.load %arg4[%c0_5, %c0_6, %c0_7] : memref<3x64x128xf32, #tpu.memory_space<vmem>>, vector<1x64x128xf32>
    %4 = vector.shape_cast %3 : vector<1x64x128xf32> to vector<64x128xf32>
    %cst = arith.constant dense<0.000000e+00> : vector<32x128xf32>
    %5 = tpu.matmul %2, %4, %cst {dimension_numbers = #tpu.dot_dimension_numbers<[1], [0], [0], [1], [0, 0, 1, 1], [], []>} : vector<32x64xf32>, vector<64x128xf32>, vector<32x128xf32> -> vector<32x128xf32>
    %c1 = arith.constant 1 : index
    %c0_8 = arith.constant 0 : index
    %c0_9 = arith.constant 0 : index
    %6 = vector.load %arg4[%c1, %c0_8, %c0_9] : memref<3x64x128xf32, #tpu.memory_space<vmem>>, vector<1x64x128xf32>
    %7 = vector.shape_cast %6 : vector<1x64x128xf32> to vector<64x128xf32>
    %cst_10 = arith.constant dense<0.000000e+00> : vector<32x128xf32>
    %8 = tpu.matmul %2, %7, %cst_10 {dimension_numbers = #tpu.dot_dimension_numbers<[1], [0], [0], [1], [0, 0, 1, 1], [], []>} : vector<32x64xf32>, vector<64x128xf32>, vector<32x128xf32> -> vector<32x128xf32>
    %c2 = arith.constant 2 : index
    %c0_11 = arith.constant 0 : index
    %c0_12 = arith.constant 0 : index
    %9 = vector.load %arg4[%c2, %c0_11, %c0_12] : memref<3x64x128xf32, #tpu.memory_space<vmem>>, vector<1x64x128xf32>
    %10 = vector.shape_cast %9 : vector<1x64x128xf32> to vector<64x128xf32>
    %cst_13 = arith.constant dense<0.000000e+00> : vector<32x128xf32>
    %11 = tpu.matmul %2, %10, %cst_13 {dimension_numbers = #tpu.dot_dimension_numbers<[1], [0], [0], [1], [0, 0, 1, 1], [], []>} : vector<32x64xf32>, vector<64x128xf32>, vector<32x128xf32> -> vector<32x128xf32>
    %c1_i32 = arith.constant 1 : i32
    %12 = tpu.dynamic_rotate %5 by %c1_i32 dim 0 : vector<32x128xf32>, i32 -> vector<32x128xf32>
    %13 = vector.broadcast %0 : vector<32x1xf32> to vector<32x128xf32>
    %14 = arith.mulf %12, %13 : vector<32x128xf32>
    %15 = arith.addf %14, %8 : vector<32x128xf32>
    %c31_i32 = arith.constant 31 : i32
    %16 = tpu.dynamic_rotate %11 by %c31_i32 dim 0 : vector<32x128xf32>, i32 -> vector<32x128xf32>
    %17 = vector.broadcast %1 : vector<32x1xf32> to vector<32x128xf32>
    %18 = arith.mulf %16, %17 : vector<32x128xf32>
    %19 = arith.addf %15, %18 : vector<32x128xf32>
    %c0_14 = arith.constant 0 : index
    %c0_15 = arith.constant 0 : index
    %20 = vector.load %arg5[%c0_14, %c0_15] : memref<1x128xf32, #tpu.memory_space<vmem>>, vector<1x128xf32>
    %21 = vector.broadcast %20 : vector<1x128xf32> to vector<32x128xf32>
    %22 = arith.addf %19, %21 : vector<32x128xf32>
    %cst_16 = arith.constant 5.000000e-01 : f32
    %23 = vector.broadcast %cst_16 : f32 to vector<32x128xf32>
    %24 = arith.mulf %23, %22 : vector<32x128xf32>
    %cst_17 = arith.constant 2.000000e+00 : f32
    %25 = math.sqrt %cst_17 : f32
    %26 = vector.broadcast %25 : f32 to vector<32x128xf32>
    %27 = arith.divf %22, %26 : vector<32x128xf32>
    %28 = math.erf %27 : vector<32x128xf32>
    %cst_18 = arith.constant 1.000000e+00 : f32
    %29 = vector.broadcast %cst_18 : f32 to vector<32x128xf32>
    %30 = arith.addf %29, %28 : vector<32x128xf32>
    %31 = arith.mulf %24, %30 : vector<32x128xf32>
    %c0_19 = arith.constant 0 : index
    %c0_20 = arith.constant 0 : index
    %c0_21 = arith.constant 0 : index
    %32 = vector.load %arg6[%c0_19, %c0_20, %c0_21] : memref<3x128x128xf32, #tpu.memory_space<vmem>>, vector<1x128x128xf32>
    %33 = vector.shape_cast %32 : vector<1x128x128xf32> to vector<128x128xf32>
    %cst_22 = arith.constant dense<0.000000e+00> : vector<32x128xf32>
    %34 = tpu.matmul %31, %33, %cst_22 {dimension_numbers = #tpu.dot_dimension_numbers<[1], [0], [0], [1], [0, 0, 1, 1], [], []>} : vector<32x128xf32>, vector<128x128xf32>, vector<32x128xf32> -> vector<32x128xf32>
    %c1_23 = arith.constant 1 : index
    %c0_24 = arith.constant 0 : index
    %c0_25 = arith.constant 0 : index
    %35 = vector.load %arg6[%c1_23, %c0_24, %c0_25] : memref<3x128x128xf32, #tpu.memory_space<vmem>>, vector<1x128x128xf32>
    %36 = vector.shape_cast %35 : vector<1x128x128xf32> to vector<128x128xf32>
    %cst_26 = arith.constant dense<0.000000e+00> : vector<32x128xf32>
    %37 = tpu.matmul %31, %36, %cst_26 {dimension_numbers = #tpu.dot_dimension_numbers<[1], [0], [0], [1], [0, 0, 1, 1], [], []>} : vector<32x128xf32>, vector<128x128xf32>, vector<32x128xf32> -> vector<32x128xf32>
    %c2_27 = arith.constant 2 : index
    %c0_28 = arith.constant 0 : index
    %c0_29 = arith.constant 0 : index
    %38 = vector.load %arg6[%c2_27, %c0_28, %c0_29] : memref<3x128x128xf32, #tpu.memory_space<vmem>>, vector<1x128x128xf32>
    %39 = vector.shape_cast %38 : vector<1x128x128xf32> to vector<128x128xf32>
    %cst_30 = arith.constant dense<0.000000e+00> : vector<32x128xf32>
    %40 = tpu.matmul %31, %39, %cst_30 {dimension_numbers = #tpu.dot_dimension_numbers<[1], [0], [0], [1], [0, 0, 1, 1], [], []>} : vector<32x128xf32>, vector<128x128xf32>, vector<32x128xf32> -> vector<32x128xf32>
    %c1_i32_31 = arith.constant 1 : i32
    %41 = tpu.dynamic_rotate %34 by %c1_i32_31 dim 0 : vector<32x128xf32>, i32 -> vector<32x128xf32>
    %42 = vector.broadcast %0 : vector<32x1xf32> to vector<32x128xf32>
    %43 = arith.mulf %41, %42 : vector<32x128xf32>
    %44 = arith.addf %43, %37 : vector<32x128xf32>
    %c31_i32_32 = arith.constant 31 : i32
    %45 = tpu.dynamic_rotate %40 by %c31_i32_32 dim 0 : vector<32x128xf32>, i32 -> vector<32x128xf32>
    %46 = vector.broadcast %1 : vector<32x1xf32> to vector<32x128xf32>
    %47 = arith.mulf %45, %46 : vector<32x128xf32>
    %48 = arith.addf %44, %47 : vector<32x128xf32>
    %c0_33 = arith.constant 0 : index
    %c0_34 = arith.constant 0 : index
    %49 = vector.load %arg7[%c0_33, %c0_34] : memref<1x128xf32, #tpu.memory_space<vmem>>, vector<1x128xf32>
    %50 = vector.broadcast %49 : vector<1x128xf32> to vector<32x128xf32>
    %51 = arith.addf %48, %50 : vector<32x128xf32>
    %cst_35 = arith.constant 5.000000e-01 : f32
    %52 = vector.broadcast %cst_35 : f32 to vector<32x128xf32>
    %53 = arith.mulf %52, %51 : vector<32x128xf32>
    %cst_36 = arith.constant 2.000000e+00 : f32
    %54 = math.sqrt %cst_36 : f32
    %55 = vector.broadcast %54 : f32 to vector<32x128xf32>
    %56 = arith.divf %51, %55 : vector<32x128xf32>
    %57 = math.erf %56 : vector<32x128xf32>
    %cst_37 = arith.constant 1.000000e+00 : f32
    %58 = vector.broadcast %cst_37 : f32 to vector<32x128xf32>
    %59 = arith.addf %58, %57 : vector<32x128xf32>
    %60 = arith.mulf %53, %59 : vector<32x128xf32>
    %c0_38 = arith.constant 0 : index
    %c0_39 = arith.constant 0 : index
    %61 = vector.load %arg8[%c0_38, %c0_39] : memref<32x128xf32, #tpu.memory_space<vmem>>, vector<32x128xf32>
    tpu.vector_store %arg8[%c0_38, %c0_39], %60 {strides = array<i32>} : memref<32x128xf32, #tpu.memory_space<vmem>>, vector<32x128xf32>,
    return
  }
  func.func @transform_0(%arg0: i32) -> (i32, i32) {
    %c0_i32 = arith.constant 0 : i32
    %c0_i32_0 = arith.constant 0 : i32
    return %arg0, %c0_i32 : i32, i32
  }
  func.func @transform_1(%arg0: i32) -> (i32, i32) {
    %c0_i32 = arith.constant 0 : i32
    %c0_i32_0 = arith.constant 0 : i32
    %c0_i32_1 = arith.constant 0 : i32
    return %c0_i32, %c0_i32_0 : i32, i32
  }
  func.func @transform_2(%arg0: i32) -> (i32, i32) {
    %c0_i32 = arith.constant 0 : i32
    %c0_i32_0 = arith.constant 0 : i32
    %c0_i32_1 = arith.constant 0 : i32
    return %c0_i32, %c0_i32_0 : i32, i32
  }
  func.func @transform_3(%arg0: i32) -> (i32, i32, i32) {
    %c0_i32 = arith.constant 0 : i32
    %c0_i32_0 = arith.constant 0 : i32
    %c0_i32_1 = arith.constant 0 : i32
    %c0_i32_2 = arith.constant 0 : i32
    return %c0_i32, %c0_i32_0, %c0_i32_1 : i32, i32, i32
  }
  func.func @transform_4(%arg0: i32) -> (i32, i32) {
    %c0_i32 = arith.constant 0 : i32
    %c0_i32_0 = arith.constant 0 : i32
    %c0_i32_1 = arith.constant 0 : i32
    return %c0_i32, %c0_i32_0 : i32, i32
  }
  func.func @transform_5(%arg0: i32) -> (i32, i32, i32) {
    %c0_i32 = arith.constant 0 : i32
    %c0_i32_0 = arith.constant 0 : i32
    %c0_i32_1 = arith.constant 0 : i32
    %c0_i32_2 = arith.constant 0 : i32
    return %c0_i32, %c0_i32_0, %c0_i32_1 : i32, i32, i32
  }
  func.func @transform_6(%arg0: i32) -> (i32, i32) {
    %c0_i32 = arith.constant 0 : i32
    %c0_i32_0 = arith.constant 0 : i32
    %c0_i32_1 = arith.constant 0 : i32
    return %c0_i32, %c0_i32_0 : i32, i32
  }
  func.func @transform_7(%arg0: i32) -> (i32, i32) {
    %c0_i32 = arith.constant 0 : i32
    %c0_i32_0 = arith.constant 0 : i32
    return %arg0, %c0_i32 : i32, i32
  }
}

</mosaic_0001>

<llo_original>
// kernel: tile.32
$region0: #{tile.32}
  #allocation0 [shape = 's32[1]{0}', space=sflag, size = 0x4, scoped, tag = 'scoped memory for tile.32']
  %s0 = inlined_call_operand.vmem [shape: f32[8], index: 0, kind: input, shape index: {}]
  %s1 = inlined_call_operand.vmem [shape: f32[16,8], index: 1, kind: output, shape index: {}]
  // Predicated region
  $region2: #{tile.32} parent=0 // pred_check
    _
  $region3: #{tile.32} parent=0 // pred_check_branch
    %3 = sbr.rel (0) target = $region5
  $region4: #{tile.32} parent=0 // pred_region
    _
  $region5: #{tile.32} parent=0 // pred_fallthru
    _
  %v4 = vld [vmem:[%s0] ss:$0 sm:$0xff]
  %5 = vst [vmem:[%s1] sm:$0xff] %v4
  %s6 = scalar_lea.vmem %s1, 8
  %7 = vst [vmem:[%s6] sm:$0xff] %v4

// kernel: mul.13
$region0: #{mul.13}
  %s0 = inlined_call_operand.vmem [shape: f32[16,8], index: 0, kind: input, shape index: {}]
  %s1 = inlined_call_operand.vmem [shape: f32[128], index: 1, kind: output, shape index: {}]
  $region1: #{mul.13} parent=0
    #allocation0 [shape = 'u8[4096]{0}', space=vmem, size = 0x1000, scoped, tag = 'scoped mem for output reshape']
    %v2 = vld [vmem:[%s0] sm:$0x1]
    %vm3 = vcmask 64512
    %4 = vst.msk [vmem:[#allocation0] sm:$0x1] %vm3, %v2
    %s5 = scalar_lea.vmem %s0, 15
    %v6 = vld [vmem:[%s5] sm:$0x1]
    %7 = vrot.lane.b32.xlu0 %v6, 120
    %v8 = vpop.permute.xlu0 %7
    %vm9 = vcmask 1048512
    %10 = vst.msk [vmem:[#allocation0] sm:$0x1] %vm9, %v8
    %s11 = scalar_lea.vmem %s0, 14
    %v12 = vld [vmem:[%s11] sm:$0x1]
    %13 = vrot.lane.b32.xlu0 %v12, 112
    %v14 = vpop.permute.xlu0 %13
    %vm15 = vcmask 982912
    %16 = vst.msk [vmem:[#allocation0] sm:$0x1] %vm15, %v14
    %s17 = scalar_lea.vmem %s0, 13
    %v18 = vld [vmem:[%s17] sm:$0x1]
    %19 = vrot.lane.b32.xlu0 %v18, 104
    %v20 = vpop.permute.xlu0 %19
    %vm21 = vcmask 917312
    %22 = vst.msk [vmem:[#allocation0] sm:$0x1] %vm21, %v20
    %s23 = scalar_lea.vmem %s0, 12
    %v24 = vld [vmem:[%s23] sm:$0x1]
    %25 = vrot.lane.b32.xlu0 %v24, 96
    %v26 = vpop.permute.xlu0 %25
    %vm27 = vcmask 851712
    %28 = vst.msk [vmem:[#allocation0] sm:$0x1] %vm27, %v26
    %s29 = scalar_lea.vmem %s0, 11
    %v30 = vld [vmem:[%s29] sm:$0x1]
    %31 = vrot.lane.b32.xlu0 %v30, 88
    %v32 = vpop.permute.xlu0 %31
    %vm33 = vcmask 786112
    %34 = vst.msk [vmem:[#allocation0] sm:$0x1] %vm33, %v32
    %s35 = scalar_lea.vmem %s0, 10
    %v36 = vld [vmem:[%s35] sm:$0x1]
    %37 = vrot.lane.b32.xlu0 %v36, 80
    %v38 = vpop.permute.xlu0 %37
    %vm39 = vcmask 720512
    %40 = vst.msk [vmem:[#allocation0] sm:$0x1] %vm39, %v38
    %s41 = scalar_lea.vmem %s0, 9
    %v42 = vld [vmem:[%s41] sm:$0x1]
    %43 = vrot.lane.b32.xlu0 %v42, 72
    %v44 = vpop.permute.xlu0 %43
    %vm45 = vcmask 654912
    %46 = vst.msk [vmem:[#allocation0] sm:$0x1] %vm45, %v44
    %s47 = scalar_lea.vmem %s0, 8
    %v48 = vld [vmem:[%s47] sm:$0x1]
    %49 = vrot.lane.b32.xlu0 %v48, 64
    %v50 = vpop.permute.xlu0 %49
    %vm51 = vcmask 589312
    %52 = vst.msk [vmem:[#allocation0] sm:$0x1] %vm51, %v50
    %s53 = scalar_lea.vmem %s0, 7
    %v54 = vld [vmem:[%s53] sm:$0x1]
    %55 = vrot.lane.b32.xlu0 %v54, 56
    %v56 = vpop.permute.xlu0 %55
    %vm57 = vcmask 523712
    %58 = vst.msk [vmem:[#allocation0] sm:$0x1] %vm57, %v56
    %s59 = scalar_lea.vmem %s0, 6
    %v60 = vld [vmem:[%s59] sm:$0x1]
    %61 = vrot.lane.b32.xlu0 %v60, 48
    %v62 = vpop.permute.xlu0 %61
    %vm63 = vcmask 458112
    %64 = vst.msk [vmem:[#allocation0] sm:$0x1] %vm63, %v62
    %s65 = scalar_lea.vmem %s0, 5
    %v66 = vld [vmem:[%s65] sm:$0x1]
    %67 = vrot.lane.b32.xlu0 %v66, 40
    %v68 = vpop.permute.xlu0 %67
    %vm69 = vcmask 392512
    %70 = vst.msk [vmem:[#allocation0] sm:$0x1] %vm69, %v68
    %s71 = scalar_lea.vmem %s0, 4
    %v72 = vld [vmem:[%s71] sm:$0x1]
    %73 = vrot.lane.b32.xlu0 %v72, 32
    %v74 = vpop.permute.xlu0 %73
    %vm75 = vcmask 326912
    %76 = vst.msk [vmem:[#allocation0] sm:$0x1] %vm75, %v74
    %s77 = scalar_lea.vmem %s0, 3
    %v78 = vld [vmem:[%s77] sm:$0x1]
    %79 = vrot.lane.b32.xlu0 %v78, 24
    %v80 = vpop.permute.xlu0 %79
    %vm81 = vcmask 261312
    %82 = vst.msk [vmem:[#allocation0] sm:$0x1] %vm81, %v80
    %s83 = scalar_lea.vmem %s0, 2
    %v84 = vld [vmem:[%s83] sm:$0x1]
    %85 = vrot.lane.b32.xlu0 %v84, 16
    %v86 = vpop.permute.xlu0 %85
    %vm87 = vcmask 195712
    %88 = vst.msk [vmem:[#allocation0] sm:$0x1] %vm87, %v86
    %s89 = scalar_lea.vmem %s0, 1
    %v90 = vld [vmem:[%s89] sm:$0x1]
    %91 = vrot.lane.b32.xlu0 %v90, 8
    %v92 = vpop.permute.xlu0 %91
    %vm93 = vcmask 130112
    %94 = vst.msk [vmem:[#allocation0] sm:$0x1] %vm93, %v92
    %s96 = sshllo.u32 0, 1
    %v98 = vld [vmem:[#allocation0] sm:%s96]
    %s99 = sshllo.u32 0, 1
    %100 = vst [vmem:[%s1] sm:%s99] %v98

// kernel: tile.37
$region0: #{tile.37}
  %s0 = inlined_call_operand.vmem [shape: f32[16,8], index: 0, kind: input, shape index: {}]
  %s1 = inlined_call_operand.vmem [shape: f32[1,128], index: 1, kind: output, shape index: {}]
  $region1: #{tile.37} parent=0
    #allocation0 [shape = 'u8[4096]{0}', space=vmem, size = 0x1000, scoped, tag = 'scoped mem for output reshape']
    %v2 = vld [vmem:[%s0] sm:$0x1]
    %vm3 = vcmask 64512
    %4 = vst.msk [vmem:[#allocation0] sm:$0x1] %vm3, %v2
    %s5 = scalar_lea.vmem %s0, 15
    %v6 = vld [vmem:[%s5] sm:$0x1]
    %7 = vrot.lane.b32.xlu0 %v6, 120
    %v8 = vpop.permute.xlu0 %7
    %vm9 = vcmask 1048512
    %10 = vst.msk [vmem:[#allocation0] sm:$0x1] %vm9, %v8
    %s11 = scalar_lea.vmem %s0, 14
    %v12 = vld [vmem:[%s11] sm:$0x1]
    %13 = vrot.lane.b32.xlu0 %v12, 112
    %v14 = vpop.permute.xlu0 %13
    %vm15 = vcmask 982912
    %16 = vst.msk [vmem:[#allocation0] sm:$0x1] %vm15, %v14
    %s17 = scalar_lea.vmem %s0, 13
    %v18 = vld [vmem:[%s17] sm:$0x1]
    %19 = vrot.lane.b32.xlu0 %v18, 104
    %v20 = vpop.permute.xlu0 %19
    %vm21 = vcmask 917312
    %22 = vst.msk [vmem:[#allocation0] sm:$0x1] %vm21, %v20
    %s23 = scalar_lea.vmem %s0, 12
    %v24 = vld [vmem:[%s23] sm:$0x1]
    %25 = vrot.lane.b32.xlu0 %v24, 96
    %v26 = vpop.permute.xlu0 %25
    %vm27 = vcmask 851712
    %28 = vst.msk [vmem:[#allocation0] sm:$0x1] %vm27, %v26
    %s29 = scalar_lea.vmem %s0, 11
    %v30 = vld [vmem:[%s29] sm:$0x1]
    %31 = vrot.lane.b32.xlu0 %v30, 88
    %v32 = vpop.permute.xlu0 %31
    %vm33 = vcmask 786112
    %34 = vst.msk [vmem:[#allocation0] sm:$0x1] %vm33, %v32
    %s35 = scalar_lea.vmem %s0, 10
    %v36 = vld [vmem:[%s35] sm:$0x1]
    %37 = vrot.lane.b32.xlu0 %v36, 80
    %v38 = vpop.permute.xlu0 %37
    %vm39 = vcmask 720512
    %40 = vst.msk [vmem:[#allocation0] sm:$0x1] %vm39, %v38
    %s41 = scalar_lea.vmem %s0, 9
    %v42 = vld [vmem:[%s41] sm:$0x1]
    %43 = vrot.lane.b32.xlu0 %v42, 72
    %v44 = vpop.permute.xlu0 %43
    %vm45 = vcmask 654912
    %46 = vst.msk [vmem:[#allocation0] sm:$0x1] %vm45, %v44
    %s47 = scalar_lea.vmem %s0, 8
    %v48 = vld [vmem:[%s47] sm:$0x1]
    %49 = vrot.lane.b32.xlu0 %v48, 64
    %v50 = vpop.permute.xlu0 %49
    %vm51 = vcmask 589312
    %52 = vst.msk [vmem:[#allocation0] sm:$0x1] %vm51, %v50
    %s53 = scalar_lea.vmem %s0, 7
    %v54 = vld [vmem:[%s53] sm:$0x1]
    %55 = vrot.lane.b32.xlu0 %v54, 56
    %v56 = vpop.permute.xlu0 %55
    %vm57 = vcmask 523712
    %58 = vst.msk [vmem:[#allocation0] sm:$0x1] %vm57, %v56
    %s59 = scalar_lea.vmem %s0, 6
    %v60 = vld [vmem:[%s59] sm:$0x1]
    %61 = vrot.lane.b32.xlu0 %v60, 48
    %v62 = vpop.permute.xlu0 %61
    %vm63 = vcmask 458112
    %64 = vst.msk [vmem:[#allocation0] sm:$0x1] %vm63, %v62
    %s65 = scalar_lea.vmem %s0, 5
    %v66 = vld [vmem:[%s65] sm:$0x1]
    %67 = vrot.lane.b32.xlu0 %v66, 40
    %v68 = vpop.permute.xlu0 %67
    %vm69 = vcmask 392512
    %70 = vst.msk [vmem:[#allocation0] sm:$0x1] %vm69, %v68
    %s71 = scalar_lea.vmem %s0, 4
    %v72 = vld [vmem:[%s71] sm:$0x1]
    %73 = vrot.lane.b32.xlu0 %v72, 32
    %v74 = vpop.permute.xlu0 %73
    %vm75 = vcmask 326912
    %76 = vst.msk [vmem:[#allocation0] sm:$0x1] %vm75, %v74
    %s77 = scalar_lea.vmem %s0, 3
    %v78 = vld [vmem:[%s77] sm:$0x1]
    %79 = vrot.lane.b32.xlu0 %v78, 24
    %v80 = vpop.permute.xlu0 %79
    %vm81 = vcmask 261312
    %82 = vst.msk [vmem:[#allocation0] sm:$0x1] %vm81, %v80
    %s83 = scalar_lea.vmem %s0, 2
    %v84 = vld [vmem:[%s83] sm:$0x1]
    %85 = vrot.lane.b32.xlu0 %v84, 16
    %v86 = vpop.permute.xlu0 %85
    %vm87 = vcmask 195712
    %88 = vst.msk [vmem:[#allocation0] sm:$0x1] %vm87, %v86
    %s89 = scalar_lea.vmem %s0, 1
    %v90 = vld [vmem:[%s89] sm:$0x1]
    %91 = vrot.lane.b32.xlu0 %v90, 8
    %v92 = vpop.permute.xlu0 %91
    %vm93 = vcmask 130112
    %94 = vst.msk [vmem:[#allocation0] sm:$0x1] %vm93, %v92
    %s96 = sshllo.u32 0, 1
    %v98 = vld [vmem:[#allocation0] sm:%s96]
    %s99 = sshllo.u32 0, 1
    %100 = vst [vmem:[%s1] sm:%s99] %v98

// kernel: double_conv_forward.1
$region0: #{double_conv_forward.1}
  #allocation0 [shape = 'u32[]', space=smem, size = 0x4, offset = 0x4, fixed_abs, tag = 'smem constant byte address 0x4 - core index']
  #allocation1 [shape = 'u32[144,128]{1,0:T(1,128)}', space=vmem, size = 0x12000, scoped, tag = 'internal scratch']
  %s0 = inlined_call_operand.vmem [shape: f32[32,64], index: 0, kind: input, shape index: {}]
  %s1 = inlined_call_operand.vmem [shape: f32[32,1], index: 1, kind: input, shape index: {}]
  %s2 = inlined_call_operand.vmem [shape: f32[32,1], index: 2, kind: input, shape index: {}]
  %s3 = inlined_call_operand.vmem [shape: f32[3,64,128], index: 3, kind: input, shape index: {}]
  %s4 = inlined_call_operand.vmem [shape: f32[1,128], index: 4, kind: input, shape index: {}]
  %s5 = inlined_call_operand.vmem [shape: f32[3,128,128], index: 5, kind: input, shape index: {}]
  %s6 = inlined_call_operand.vmem [shape: f32[1,128], index: 6, kind: input, shape index: {}]
  %s7 = inlined_call_operand.vmem [shape: f32[32,128], index: 7, kind: output, shape index: {}]
  %s8 = sld [smem:[#allocation0]]
  $region38: #{double_conv_forward.1} parent=0
    _
  %s10 = ssub.s32 1, %s8
  %s11 = scalar_select 0, %s10, %s8
  // Predicated region
  $region2: #{double_conv_forward.1} parent=0 // pred_check
    _
  $region3: #{double_conv_forward.1} parent=0 // pred_check_branch
    %13 = sbr.rel (0) target = $region5
  $region4: #{double_conv_forward.1} parent=0 // pred_region
    _
  $region5: #{double_conv_forward.1} parent=0 // pred_fallthru
    _
  // Predicated region
  $region6: #{double_conv_forward.1} parent=0 // pred_check
    _
  $region7: #{double_conv_forward.1} parent=0 // pred_check_branch
    %15 = sbr.rel (0) target = $region9
  $region8: #{double_conv_forward.1} parent=0 // pred_region
    _
  $region9: #{double_conv_forward.1} parent=0 // pred_fallthru
    _
  // Predicated region
  $region10: #{double_conv_forward.1} parent=0 // pred_check
    _
  $region11: #{double_conv_forward.1} parent=0 // pred_check_branch
    %17 = sbr.rel (0) target = $region13
  $region12: #{double_conv_forward.1} parent=0 // pred_region
    _
  $region13: #{double_conv_forward.1} parent=0 // pred_fallthru
    _
  // Predicated region
  $region14: #{double_conv_forward.1} parent=0 // pred_check
    _
  $region15: #{double_conv_forward.1} parent=0 // pred_check_branch
    %19 = sbr.rel (0) target = $region17
  $region16: #{double_conv_forward.1} parent=0 // pred_region
    _
  $region17: #{double_conv_forward.1} parent=0 // pred_fallthru
    _
  // Predicated region
  $region18: #{double_conv_forward.1} parent=0 // pred_check
    _
  $region19: #{double_conv_forward.1} parent=0 // pred_check_branch
    %21 = sbr.rel (0) target = $region21
  $region20: #{double_conv_forward.1} parent=0 // pred_region
    _
  $region21: #{double_conv_forward.1} parent=0 // pred_fallthru
    _
  // Predicated region
  $region22: #{double_conv_forward.1} parent=0 // pred_check
    _
  $region23: #{double_conv_forward.1} parent=0 // pred_check_branch
    %23 = sbr.rel (0) target = $region25
  $region24: #{double_conv_forward.1} parent=0 // pred_region
    _
  $region25: #{double_conv_forward.1} parent=0 // pred_fallthru
    _
  // Predicated region
  $region26: #{double_conv_forward.1} parent=0 // pred_check
    _
  $region27: #{double_conv_forward.1} parent=0 // pred_check_branch
    %25 = sbr.rel (0) target = $region29
  $region28: #{double_conv_forward.1} parent=0 // pred_region
    _
  $region29: #{double_conv_forward.1} parent=0 // pred_fallthru
    _
  %v26 = vld [vmem:[%s1] sm:$0xff]
  %v27 = vld [vmem:[%s1 + $0x8] sm:$0xff]
  %v28 = vld [vmem:[%s1 + $0x10] sm:$0xff]
  %v29 = vld [vmem:[%s1 + $0x18] sm:$0xff]
  %v30 = vld [vmem:[%s2] sm:$0xff]
  %v31 = vld [vmem:[%s2 + $0x8] sm:$0xff]
  %v32 = vld [vmem:[%s2 + $0x10] sm:$0xff]
  %v33 = vld [vmem:[%s2 + $0x18] sm:$0xff]
  %v34 = vld [vmem:[%s0] sm:$0xff]
  %v35 = vld [vmem:[%s0 + $0x8] sm:$0xff]
  %v36 = vld [vmem:[%s0 + $0x10] sm:$0xff]
  %v37 = vld [vmem:[%s0 + $0x18] sm:$0xff]
  %v38 = vld [vmem:[%s3] sm:$0xff]
  %v39 = vld [vmem:[%s3 + $0x8] sm:$0xff]
  %v40 = vld [vmem:[%s3 + $0x10] sm:$0xff]
  %v41 = vld [vmem:[%s3 + $0x18] sm:$0xff]
  %v42 = vld [vmem:[%s3 + $0x20] sm:$0xff]
  %v43 = vld [vmem:[%s3 + $0x28] sm:$0xff]
  %v44 = vld [vmem:[%s3 + $0x30] sm:$0xff]
  %v45 = vld [vmem:[%s3 + $0x38] sm:$0xff]
  %vm46 = vcmask 523264
  %v48 = vsel %vm46, %v34, 0
  %v51 = vsel %vm46, %v35, 0
  %v54 = vsel %vm46, %v36, 0
  %v57 = vsel %vm46, %v37, 0
  %59 = vmatprep.subr.mxu0 0.0
  %60 = vmatpush1.msra.mxu0 %v38
  %61 = vmatprep.subr.mxu0 0.0
  %62 = vmatpush1.msra.mxu0 %v39
  %63 = vmatprep.subr.mxu0 0.0
  %64 = vmatpush1.msra.mxu0 %v40
  %65 = vmatprep.subr.mxu0 0.0
  %66 = vmatpush1.msra.mxu0 %v41
  %67 = vmatprep.subr.mxu0 0.0
  %68 = vmatpush1.msra.mxu0 %v42
  %69 = vmatprep.subr.mxu0 0.0
  %70 = vmatpush1.msra.mxu0 %v43
  %71 = vmatprep.subr.mxu0 0.0
  %72 = vmatpush1.msra.mxu0 %v44
  %73 = vmatprep.subr.mxu0 0.0
  %74 = vmatpush1.msra.mxu0 %v45
  %75 = vmatprep.subr.mxu0 0.0
  %76 = vmatpush1.msra.mxu0 0.0
  %77 = vmatprep.subr.mxu0 0.0
  %78 = vmatpush1.msra.mxu0 0.0
  %79 = vmatprep.subr.mxu0 0.0
  %80 = vmatpush1.msra.mxu0 0.0
  %81 = vmatprep.subr.mxu0 0.0
  %82 = vmatpush1.msra.mxu0 0.0
  %83 = vmatprep.subr.mxu0 0.0
  %84 = vmatpush1.msra.mxu0 0.0
  %85 = vmatprep.subr.mxu0 0.0
  %86 = vmatpush1.msra.mxu0 0.0
  %87 = vmatprep.subr.mxu0 0.0
  %88 = vmatpush1.msra.mxu0 0.0
  %89 = vmatprep.subr.mxu0 0.0
  %90 = vmatpush1.msra.mxu0 0.0
  %91 = vmatprep.subr.mxu0 0.0
  %92 = vmatpush1.msra.mxu0 0.0
  %93 = vmatprep.subr.mxu0 0.0
  %94 = vmatpush1.msra.mxu0 0.0
  %95 = vmatprep.subr.mxu0 0.0
  %96 = vmatpush1.msra.mxu0 0.0
  %97 = vmatprep.subr.mxu0 0.0
  %98 = vmatpush1.msra.mxu0 0.0
  %99 = vmatprep.subr.mxu0 0.0
  %100 = vmatpush1.msra.mxu0 0.0
  %101 = vmatprep.subr.mxu0 0.0
  %102 = vmatpush1.msra.mxu0 0.0
  %103 = vmatprep.subr.mxu0 0.0
  %104 = vmatpush1.msra.mxu0 0.0
  %105 = vmatprep.subr.mxu0 0.0
  %106 = vmatpush1.msra.mxu0 0.0
  %107 = vmatprep.subr.mxu0 0.0
  %108 = vmatpush1.msra.mxu0 0.0
  %109 = vmatprep.subr.mxu0 0.0
  %110 = vmatpush1.msra.mxu0 0.0
  %111 = vmatprep.subr.mxu0 0.0
  %112 = vmatpush1.msra.mxu0 0.0
  %113 = vmatprep.subr.mxu0 0.0
  %114 = vmatpush1.msra.mxu0 0.0
  %115 = vmatprep.subr.mxu0 0.0
  %116 = vmatpush1.msra.mxu0 0.0
  %117 = vmatprep.subr.mxu0 0.0
  %118 = vmatpush1.msra.mxu0 0.0
  %119 = vmatprep.subr.mxu0 0.0
  %120 = vmatpush1.msra.mxu0 0.0
  %121 = vmatprep.subr.mxu0 0.0
  %122 = vmatpush1.msra.mxu0 0.0
  %123 = vmatprep.mubr.f32.mxu0 0.0
  %124 = vmatmul.mubr.f32.gmra.mrb[0].mxu0 %v48
  %v125 = vpop.f32.mrb[0].mxu0
  %v126 = vadd.f32 0.0, %v125
  %v127 = vpop.f32.mrb[0].mxu0
  %128 = vmatprep.mubr.f32.mxu0 0.0
  %129 = vmatmul.mubr.f32.gmra.mrb[0].mxu0 %v51
  %v130 = vpop.f32.mrb[0].mxu0
  %v131 = vadd.f32 0.0, %v130
  %v132 = vpop.f32.mrb[0].mxu0
  %133 = vmatprep.mubr.f32.mxu0 0.0
  %134 = vmatmul.mubr.f32.gmra.mrb[0].mxu0 %v54
  %v135 = vpop.f32.mrb[0].mxu0
  %v136 = vadd.f32 0.0, %v135
  %v137 = vpop.f32.mrb[0].mxu0
  %138 = vmatprep.mubr.f32.mxu0 0.0
  %139 = vmatmul.mubr.f32.gmra.mrb[0].mxu0 %v57
  %v140 = vpop.f32.mrb[0].mxu0
  %v141 = vadd.f32 0.0, %v140
  %v142 = vpop.f32.mrb[0].mxu0
  %143 = vdwg.mxu0
  %s144 = scalar_lea.vmem %s3, 64
  %v145 = vld [vmem:[%s144] sm:$0xff]
  %v146 = vld [vmem:[%s144 + $0x8] sm:$0xff]
  %v147 = vld [vmem:[%s144 + $0x10] sm:$0xff]
  %v148 = vld [vmem:[%s144 + $0x18] sm:$0xff]
  %v149 = vld [vmem:[%s144 + $0x20] sm:$0xff]
  %v150 = vld [vmem:[%s144 + $0x28] sm:$0xff]
  %v151 = vld [vmem:[%s144 + $0x30] sm:$0xff]
  %v152 = vld [vmem:[%s144 + $0x38] sm:$0xff]
  %153 = vmatprep.subr.mxu0 0.0
  %154 = vmatpush1.msra.mxu0 %v145
  %155 = vmatprep.subr.mxu0 0.0
  %156 = vmatpush1.msra.mxu0 %v146
  %157 = vmatprep.subr.mxu0 0.0
  %158 = vmatpush1.msra.mxu0 %v147
  %159 = vmatprep.subr.mxu0 0.0
  %160 = vmatpush1.msra.mxu0 %v148
  %161 = vmatprep.subr.mxu0 0.0
  %162 = vmatpush1.msra.mxu0 %v149
  %163 = vmatprep.subr.mxu0 0.0
  %164 = vmatpush1.msra.mxu0 %v150
  %165 = vmatprep.subr.mxu0 0.0
  %166 = vmatpush1.msra.mxu0 %v151
  %167 = vmatprep.subr.mxu0 0.0
  %168 = vmatpush1.msra.mxu0 %v152
  %169 = vmatprep.subr.mxu0 0.0
  %170 = vmatpush1.msra.mxu0 0.0
  %171 = vmatprep.subr.mxu0 0.0
  %172 = vmatpush1.msra.mxu0 0.0
  %173 = vmatprep.subr.mxu0 0.0
  %174 = vmatpush1.msra.mxu0 0.0
  %175 = vmatprep.subr.mxu0 0.0
  %176 = vmatpush1.msra.mxu0 0.0
  %177 = vmatprep.subr.mxu0 0.0
  %178 = vmatpush1.msra.mxu0 0.0
  %179 = vmatprep.subr.mxu0 0.0
  %180 = vmatpush1.msra.mxu0 0.0
  %181 = vmatprep.subr.mxu0 0.0
  %182 = vmatpush1.msra.mxu0 0.0
  %183 = vmatprep.subr.mxu0 0.0
  %184 = vmatpush1.msra.mxu0 0.0
  %185 = vmatprep.subr.mxu0 0.0
  %186 = vmatpush1.msra.mxu0 0.0
  %187 = vmatprep.subr.mxu0 0.0
  %188 = vmatpush1.msra.mxu0 0.0
  %189 = vmatprep.subr.mxu0 0.0
  %190 = vmatpush1.msra.mxu0 0.0
  %191 = vmatprep.subr.mxu0 0.0
  %192 = vmatpush1.msra.mxu0 0.0
  %193 = vmatprep.subr.mxu0 0.0
  %194 = vmatpush1.msra.mxu0 0.0
  %195 = vmatprep.subr.mxu0 0.0
  %196 = vmatpush1.msra.mxu0 0.0
  %197 = vmatprep.subr.mxu0 0.0
  %198 = vmatpush1.msra.mxu0 0.0
  %199 = vmatprep.subr.mxu0 0.0
  %200 = vmatpush1.msra.mxu0 0.0
  %201 = vmatprep.subr.mxu0 0.0
  %202 = vmatpush1.msra.mxu0 0.0
  %203 = vmatprep.subr.mxu0 0.0
  %204 = vmatpush1.msra.mxu0 0.0
  %205 = vmatprep.subr.mxu0 0.0
  %206 = vmatpush1.msra.mxu0 0.0
  %207 = vmatprep.subr.mxu0 0.0
  %208 = vmatpush1.msra.mxu0 0.0
  %209 = vmatprep.subr.mxu0 0.0
  %210 = vmatpush1.msra.mxu0 0.0
  %211 = vmatprep.subr.mxu0 0.0
  %212 = vmatpush1.msra.mxu0 0.0
  %213 = vmatprep.subr.mxu0 0.0
  %214 = vmatpush1.msra.mxu0 0.0
  %215 = vmatprep.subr.mxu0 0.0
  %216 = vmatpush1.msra.mxu0 0.0
  %217 = vmatprep.mubr.f32.mxu0 0.0
  %218 = vmatmul.mubr.f32.gmra.mrb[0].mxu0 %v48
  %v219 = vpop.f32.mrb[0].mxu0
  %v220 = vadd.f32 0.0, %v219
  %v221 = vpop.f32.mrb[0].mxu0
  %222 = vmatprep.mubr.f32.mxu0 0.0
  %223 = vmatmul.mubr.f32.gmra.mrb[0].mxu0 %v51
  %v224 = vpop.f32.mrb[0].mxu0
  %v225 = vadd.f32 0.0, %v224
  %v226 = vpop.f32.mrb[0].mxu0
  %227 = vmatprep.mubr.f32.mxu0 0.0
  %228 = vmatmul.mubr.f32.gmra.mrb[0].mxu0 %v54
  %v229 = vpop.f32.mrb[0].mxu0
  %v230 = vadd.f32 0.0, %v229
  %v231 = vpop.f32.mrb[0].mxu0
  %232 = vmatprep.mubr.f32.mxu0 0.0
  %233 = vmatmul.mubr.f32.gmra.mrb[0].mxu0 %v57
  %v234 = vpop.f32.mrb[0].mxu0
  %v235 = vadd.f32 0.0, %v234
  %v236 = vpop.f32.mrb[0].mxu0
  %237 = vdwg.mxu0
  %s238 = scalar_lea.vmem %s3, 128
  %v239 = vld [vmem:[%s238] sm:$0xff]
  %v240 = vld [vmem:[%s238 + $0x8] sm:$0xff]
  %v241 = vld [vmem:[%s238 + $0x10] sm:$0xff]
  %v242 = vld [vmem:[%s238 + $0x18] sm:$0xff]
  %v243 = vld [vmem:[%s238 + $0x20] sm:$0xff]
  %v244 = vld [vmem:[%s238 + $0x28] sm:$0xff]
  %v245 = vld [vmem:[%s238 + $0x30] sm:$0xff]
  %v246 = vld [vmem:[%s238 + $0x38] sm:$0xff]
  %247 = vmatprep.subr.mxu0 0.0
  %248 = vmatpush1.msra.mxu0 %v239
  %249 = vmatprep.subr.mxu0 0.0
  %250 = vmatpush1.msra.mxu0 %v240
  %251 = vmatprep.subr.mxu0 0.0
  %252 = vmatpush1.msra.mxu0 %v241
  %253 = vmatprep.subr.mxu0 0.0
  %254 = vmatpush1.msra.mxu0 %v242
  %255 = vmatprep.subr.mxu0 0.0
  %256 = vmatpush1.msra.mxu0 %v243
  %257 = vmatprep.subr.mxu0 0.0
  %258 = vmatpush1.msra.mxu0 %v244
  %259 = vmatprep.subr.mxu0 0.0
  %260 = vmatpush1.msra.mxu0 %v245
  %261 = vmatprep.subr.mxu0 0.0
  %262 = vmatpush1.msra.mxu0 %v246
  %263 = vmatprep.subr.mxu0 0.0
  %264 = vmatpush1.msra.mxu0 0.0
  %265 = vmatprep.subr.mxu0 0.0
  %266 = vmatpush1.msra.mxu0 0.0
  %267 = vmatprep.subr.mxu0 0.0
  %268 = vmatpush1.msra.mxu0 0.0
  %269 = vmatprep.subr.mxu0 0.0
  %270 = vmatpush1.msra.mxu0 0.0
  %271 = vmatprep.subr.mxu0 0.0
  %272 = vmatpush1.msra.mxu0 0.0
  %273 = vmatprep.subr.mxu0 0.0
  %274 = vmatpush1.msra.mxu0 0.0
  %275 = vmatprep.subr.mxu0 0.0
  %276 = vmatpush1.msra.mxu0 0.0
  %277 = vmatprep.subr.mxu0 0.0
  %278 = vmatpush1.msra.mxu0 0.0
  %279 = vmatprep.subr.mxu0 0.0
  %280 = vmatpush1.msra.mxu0 0.0
  %281 = vmatprep.subr.mxu0 0.0
  %282 = vmatpush1.msra.mxu0 0.0
  %283 = vmatprep.subr.mxu0 0.0
  %284 = vmatpush1.msra.mxu0 0.0
  %285 = vmatprep.subr.mxu0 0.0
  %286 = vmatpush1.msra.mxu0 0.0
  %287 = vmatprep.subr.mxu0 0.0
  %288 = vmatpush1.msra.mxu0 0.0
  %289 = vmatprep.subr.mxu0 0.0
  %290 = vmatpush1.msra.mxu0 0.0
  %291 = vmatprep.subr.mxu0 0.0
  %292 = vmatpush1.msra.mxu0 0.0
  %293 = vmatprep.subr.mxu0 0.0
  %294 = vmatpush1.msra.mxu0 0.0
  %295 = vmatprep.subr.mxu0 0.0
  %296 = vmatpush1.msra.mxu0 0.0
  %297 = vmatprep.subr.mxu0 0.0
  %298 = vmatpush1.msra.mxu0 0.0
  %299 = vmatprep.subr.mxu0 0.0
  %300 = vmatpush1.msra.mxu0 0.0
  %301 = vmatprep.subr.mxu0 0.0
  %302 = vmatpush1.msra.mxu0 0.0
  %303 = vmatprep.subr.mxu0 0.0
  %304 = vmatpush1.msra.mxu0 0.0
  %305 = vmatprep.subr.mxu0 0.0
  %306 = vmatpush1.msra.mxu0 0.0
  %307 = vmatprep.subr.mxu0 0.0
  %308 = vmatpush1.msra.mxu0 0.0
  %309 = vmatprep.subr.mxu0 0.0
  %310 = vmatpush1.msra.mxu0 0.0
  %311 = vmatprep.mubr.f32.mxu0 0.0
  %312 = vmatmul.mubr.f32.gmra.mrb[0].mxu0 %v48
  %v313 = vpop.f32.mrb[0].mxu0
  %v314 = vadd.f32 0.0, %v313
  %v315 = vpop.f32.mrb[0].mxu0
  %316 = vmatprep.mubr.f32.mxu0 0.0
  %317 = vmatmul.mubr.f32.gmra.mrb[0].mxu0 %v51
  %v318 = vpop.f32.mrb[0].mxu0
  %v319 = vadd.f32 0.0, %v318
  %v320 = vpop.f32.mrb[0].mxu0
  %321 = vmatprep.mubr.f32.mxu0 0.0
  %322 = vmatmul.mubr.f32.gmra.mrb[0].mxu0 %v54
  %v323 = vpop.f32.mrb[0].mxu0
  %v324 = vadd.f32 0.0, %v323
  %v325 = vpop.f32.mrb[0].mxu0
  %326 = vmatprep.mubr.f32.mxu0 0.0
  %327 = vmatmul.mubr.f32.gmra.mrb[0].mxu0 %v57
  %v328 = vpop.f32.mrb[0].mxu0
  %v329 = vadd.f32 0.0, %v328
  %v330 = vpop.f32.mrb[0].mxu0
  %331 = vdwg.mxu0
  %v332 = vrot.slane %v126, 7
  %v333 = vrot.slane %v131, 7
  %v334 = vrot.slane %v136, 7
  %v335 = vrot.slane %v141, 7
  %v336 = vlaneseq
  %v337 = vshrl.u32 %v336, 7
  %vm338 = vcmp.lt.s32.totalorder %v337, 1
  %v339 = vsel %vm338, %v334, %v335
  %v340 = vsel %vm338, %v333, %v334
  %v341 = vsel %vm338, %v332, %v333
  %v342 = vsel %vm338, %v335, %v332
  %344 = vset.pattern.permute.xlu0 0
  %345 = vperm.xlu0 %344, %v26
  %v346 = vpop.permute.xlu0 %345
  %349 = vset.pattern.permute.xlu0 0
  %350 = vperm.xlu0 %349, %v27
  %v351 = vpop.permute.xlu0 %350
  %354 = vset.pattern.permute.xlu0 0
  %355 = vperm.xlu0 %354, %v28
  %v356 = vpop.permute.xlu0 %355
  %359 = vset.pattern.permute.xlu0 0
  %360 = vperm.xlu0 %359, %v29
  %v361 = vpop.permute.xlu0 %360
  %v363 = vmul.f32 %v342, %v346
  %v364 = vmul.f32 %v341, %v351
  %v365 = vmul.f32 %v340, %v356
  %v366 = vmul.f32 %v339, %v361
  %v367 = vadd.f32 %v363, %v220
  %v368 = vadd.f32 %v364, %v225
  %v369 = vadd.f32 %v365, %v230
  %v370 = vadd.f32 %v366, %v235
  %v371 = vrot.slane %v314, 1
  %v372 = vrot.slane %v319, 1
  %v373 = vrot.slane %v324, 1
  %v374 = vrot.slane %v329, 1
  %vm375 = vcmp.lt.s32.totalorder %v337, 7
  %v376 = vsel %vm375, %v373, %v374
  %v377 = vsel %vm375, %v372, %v373
  %v378 = vsel %vm375, %v371, %v372
  %v379 = vsel %vm375, %v374, %v371
  %381 = vset.pattern.permute.xlu0 0
  %382 = vperm.xlu0 %381, %v30
  %v383 = vpop.permute.xlu0 %382
  %386 = vset.pattern.permute.xlu0 0
  %387 = vperm.xlu0 %386, %v31
  %v388 = vpop.permute.xlu0 %387
  %391 = vset.pattern.permute.xlu0 0
  %392 = vperm.xlu0 %391, %v32
  %v393 = vpop.permute.xlu0 %392
  %396 = vset.pattern.permute.xlu0 0
  %397 = vperm.xlu0 %396, %v33
  %v398 = vpop.permute.xlu0 %397
  %v400 = vmul.f32 %v378, %v383
  %v401 = vmul.f32 %v377, %v388
  %v402 = vmul.f32 %v376, %v393
  %v403 = vmul.f32 %v379, %v398
  %v404 = vadd.f32 %v367, %v400
  %v405 = vadd.f32 %v368, %v401
  %v406 = vadd.f32 %v369, %v402
  %v407 = vadd.f32 %v370, %v403
  %v408 = vld [vmem:[%s4] sm:$0x1]
  %v410 = vlaneseq
  %v411 = vshrl.u32 %v410, 7
  %v412 = vsub.s32 0, %v411
  %v413 = vrot.slane %v408, %v412
  %v415 = vadd.f32 %v404, %v413
  %v416 = vadd.f32 %v405, %v413
  %v417 = vadd.f32 %v406, %v413
  %v418 = vadd.f32 %v407, %v413
  %v419 = vmul.f32 %v415, 0.5
  %v420 = vmul.f32 %v416, 0.5
  %v421 = vmul.f32 %v417, 0.5
  %v422 = vmul.f32 %v418, 0.5
  %v423 = vrcp.pop 1.4142135
  %v424 = vmul.f32 %v415, %v423
  %v425 = vmul.f32 %v416, %v423
  %v426 = vmul.f32 %v417, %v423
  %v427 = vmul.f32 %v418, %v423
  %v428 = verf.f32.pop %v424
  %v429 = verf.f32.pop %v425
  %v430 = verf.f32.pop %v426
  %v431 = verf.f32.pop %v427
  %v432 = vadd.f32 %v428, 1.0
  %v433 = vadd.f32 %v429, 1.0
  %v434 = vadd.f32 %v430, 1.0
  %v435 = vadd.f32 %v431, 1.0
  %v436 = vmul.f32 %v419, %v432
  %v437 = vmul.f32 %v420, %v433
  %v438 = vmul.f32 %v421, %v434
  %v439 = vmul.f32 %v422, %v435
  %v440 = vld [vmem:[%s5] sm:$0xff]
  %v441 = vld [vmem:[%s5 + $0x8] sm:$0xff]
  %v442 = vld [vmem:[%s5 + $0x10] sm:$0xff]
  %v443 = vld [vmem:[%s5 + $0x18] sm:$0xff]
  %v444 = vld [vmem:[%s5 + $0x20] sm:$0xff]
  %v445 = vld [vmem:[%s5 + $0x28] sm:$0xff]
  %v446 = vld [vmem:[%s5 + $0x30] sm:$0xff]
  %v447 = vld [vmem:[%s5 + $0x38] sm:$0xff]
  %v448 = vld [vmem:[%s5 + $0x40] sm:$0xff]
  %v449 = vld [vmem:[%s5 + $0x48] sm:$0xff]
  %v450 = vld [vmem:[%s5 + $0x50] sm:$0xff]
  %v451 = vld [vmem:[%s5 + $0x58] sm:$0xff]
  %v452 = vld [vmem:[%s5 + $0x60] sm:$0xff]
  %v453 = vld [vmem:[%s5 + $0x68] sm:$0xff]
  %v454 = vld [vmem:[%s5 + $0x70] sm:$0xff]
  %v455 = vld [vmem:[%s5 + $0x78] sm:$0xff]
  %456 = vmatprep.subr.mxu0 0.0
  %457 = vmatpush1.msra.mxu0 %v440
  %458 = vmatprep.subr.mxu0 0.0
  %459 = vmatpush1.msra.mxu0 %v441
  %460 = vmatprep.subr.mxu0 0.0
  %461 = vmatpush1.msra.mxu0 %v442
  %462 = vmatprep.subr.mxu0 0.0
  %463 = vmatpush1.msra.mxu0 %v443
  %464 = vmatprep.subr.mxu0 0.0
  %465 = vmatpush1.msra.mxu0 %v444
  %466 = vmatprep.subr.mxu0 0.0
  %467 = vmatpush1.msra.mxu0 %v445
  %468 = vmatprep.subr.mxu0 0.0
  %469 = vmatpush1.msra.mxu0 %v446
  %470 = vmatprep.subr.mxu0 0.0
  %471 = vmatpush1.msra.mxu0 %v447
  %472 = vmatprep.subr.mxu0 0.0
  %473 = vmatpush1.msra.mxu0 %v448
  %474 = vmatprep.subr.mxu0 0.0
  %475 = vmatpush1.msra.mxu0 %v449
  %476 = vmatprep.subr.mxu0 0.0
  %477 = vmatpush1.msra.mxu0 %v450
  %478 = vmatprep.subr.mxu0 0.0
  %479 = vmatpush1.msra.mxu0 %v451
  %480 = vmatprep.subr.mxu0 0.0
  %481 = vmatpush1.msra.mxu0 %v452
  %482 = vmatprep.subr.mxu0 0.0
  %483 = vmatpush1.msra.mxu0 %v453
  %484 = vmatprep.subr.mxu0 0.0
  %485 = vmatpush1.msra.mxu0 %v454
  %486 = vmatprep.subr.mxu0 0.0
  %487 = vmatpush1.msra.mxu0 %v455
  %488 = vmatprep.subr.mxu0 0.0
  %489 = vmatpush1.msra.mxu0 0.0
  %490 = vmatprep.subr.mxu0 0.0
  %491 = vmatpush1.msra.mxu0 0.0
  %492 = vmatprep.subr.mxu0 0.0
  %493 = vmatpush1.msra.mxu0 0.0
  %494 = vmatprep.subr.mxu0 0.0
  %495 = vmatpush1.msra.mxu0 0.0
  %496 = vmatprep.subr.mxu0 0.0
  %497 = vmatpush1.msra.mxu0 0.0
  %498 = vmatprep.subr.mxu0 0.0
  %499 = vmatpush1.msra.mxu0 0.0
  %500 = vmatprep.subr.mxu0 0.0
  %501 = vmatpush1.msra.mxu0 0.0
  %502 = vmatprep.subr.mxu0 0.0
  %503 = vmatpush1.msra.mxu0 0.0
  %504 = vmatprep.subr.mxu0 0.0
  %505 = vmatpush1.msra.mxu0 0.0
  %506 = vmatprep.subr.mxu0 0.0
  %507 = vmatpush1.msra.mxu0 0.0
  %508 = vmatprep.subr.mxu0 0.0
  %509 = vmatpush1.msra.mxu0 0.0
  %510 = vmatprep.subr.mxu0 0.0
  %511 = vmatpush1.msra.mxu0 0.0
  %512 = vmatprep.subr.mxu0 0.0
  %513 = vmatpush1.msra.mxu0 0.0
  %514 = vmatprep.subr.mxu0 0.0
  %515 = vmatpush1.msra.mxu0 0.0
  %516 = vmatprep.subr.mxu0 0.0
  %517 = vmatpush1.msra.mxu0 0.0
  %518 = vmatprep.subr.mxu0 0.0
  %519 = vmatpush1.msra.mxu0 0.0
  %520 = vmatprep.mubr.f32.mxu0 0.0
  %521 = vmatmul.mubr.f32.gmra.mrb[0].mxu0 %v436
  %v522 = vpop.f32.mrb[0].mxu0
  %v523 = vadd.f32 0.0, %v522
  %v524 = vpop.f32.mrb[0].mxu0
  %525 = vmatprep.mubr.f32.mxu0 0.0
  %526 = vmatmul.mubr.f32.gmra.mrb[0].mxu0 %v437
  %v527 = vpop.f32.mrb[0].mxu0
  %v528 = vadd.f32 0.0, %v527
  %v529 = vpop.f32.mrb[0].mxu0
  %530 = vmatprep.mubr.f32.mxu0 0.0
  %531 = vmatmul.mubr.f32.gmra.mrb[0].mxu0 %v438
  %v532 = vpop.f32.mrb[0].mxu0
  %v533 = vadd.f32 0.0, %v532
  %v534 = vpop.f32.mrb[0].mxu0
  %535 = vmatprep.mubr.f32.mxu0 0.0
  %536 = vmatmul.mubr.f32.gmra.mrb[0].mxu0 %v439
  %v537 = vpop.f32.mrb[0].mxu0
  %v538 = vadd.f32 0.0, %v537
  %v539 = vpop.f32.mrb[0].mxu0
  %540 = vdwg.mxu0
  %s541 = scalar_lea.vmem %s5, 128
  %v542 = vld [vmem:[%s541] sm:$0xff]
  %v543 = vld [vmem:[%s541 + $0x8] sm:$0xff]
  %v544 = vld [vmem:[%s541 + $0x10] sm:$0xff]
  %v545 = vld [vmem:[%s541 + $0x18] sm:$0xff]
  %v546 = vld [vmem:[%s541 + $0x20] sm:$0xff]
  %v547 = vld [vmem:[%s541 + $0x28] sm:$0xff]
  %v548 = vld [vmem:[%s541 + $0x30] sm:$0xff]
  %v549 = vld [vmem:[%s541 + $0x38] sm:$0xff]
  %v550 = vld [vmem:[%s541 + $0x40] sm:$0xff]
  %v551 = vld [vmem:[%s541 + $0x48] sm:$0xff]
  %v552 = vld [vmem:[%s541 + $0x50] sm:$0xff]
  %v553 = vld [vmem:[%s541 + $0x58] sm:$0xff]
  %v554 = vld [vmem:[%s541 + $0x60] sm:$0xff]
  %v555 = vld [vmem:[%s541 + $0x68] sm:$0xff]
  %v556 = vld [vmem:[%s541 + $0x70] sm:$0xff]
  %v557 = vld [vmem:[%s541 + $0x78] sm:$0xff]
  %558 = vmatprep.subr.mxu0 0.0
  %559 = vmatpush1.msra.mxu0 %v542
  %560 = vmatprep.subr.mxu0 0.0
  %561 = vmatpush1.msra.mxu0 %v543
  %562 = vmatprep.subr.mxu0 0.0
  %563 = vmatpush1.msra.mxu0 %v544
  %564 = vmatprep.subr.mxu0 0.0
  %565 = vmatpush1.msra.mxu0 %v545
  %566 = vmatprep.subr.mxu0 0.0
  %567 = vmatpush1.msra.mxu0 %v546
  %568 = vmatprep.subr.mxu0 0.0
  %569 = vmatpush1.msra.mxu0 %v547
  %570 = vmatprep.subr.mxu0 0.0
  %571 = vmatpush1.msra.mxu0 %v548
  %572 = vmatprep.subr.mxu0 0.0
  %573 = vmatpush1.msra.mxu0 %v549
  %574 = vmatprep.subr.mxu0 0.0
  %575 = vmatpush1.msra.mxu0 %v550
  %576 = vmatprep.subr.mxu0 0.0
  %577 = vmatpush1.msra.mxu0 %v551
  %578 = vmatprep.subr.mxu0 0.0
  %579 = vmatpush1.msra.mxu0 %v552
  %580 = vmatprep.subr.mxu0 0.0
  %581 = vmatpush1.msra.mxu0 %v553
  %582 = vmatprep.subr.mxu0 0.0
  %583 = vmatpush1.msra.mxu0 %v554
  %584 = vmatprep.subr.mxu0 0.0
  %585 = vmatpush1.msra.mxu0 %v555
  %586 = vmatprep.subr.mxu0 0.0
  %587 = vmatpush1.msra.mxu0 %v556
  %588 = vmatprep.subr.mxu0 0.0
  %589 = vmatpush1.msra.mxu0 %v557
  %590 = vmatprep.subr.mxu0 0.0
  %591 = vmatpush1.msra.mxu0 0.0
  %592 = vmatprep.subr.mxu0 0.0
  %593 = vmatpush1.msra.mxu0 0.0
  %594 = vmatprep.subr.mxu0 0.0
  %595 = vmatpush1.msra.mxu0 0.0
  %596 = vmatprep.subr.mxu0 0.0
  %597 = vmatpush1.msra.mxu0 0.0
  %598 = vmatprep.subr.mxu0 0.0
  %599 = vmatpush1.msra.mxu0 0.0
  %600 = vmatprep.subr.mxu0 0.0
  %601 = vmatpush1.msra.mxu0 0.0
  %602 = vmatprep.subr.mxu0 0.0
  %603 = vmatpush1.msra.mxu0 0.0
  %604 = vmatprep.subr.mxu0 0.0
  %605 = vmatpush1.msra.mxu0 0.0
  %606 = vmatprep.subr.mxu0 0.0
  %607 = vmatpush1.msra.mxu0 0.0
  %608 = vmatprep.subr.mxu0 0.0
  %609 = vmatpush1.msra.mxu0 0.0
  %610 = vmatprep.subr.mxu0 0.0
  %611 = vmatpush1.msra.mxu0 0.0
  %612 = vmatprep.subr.mxu0 0.0
  %613 = vmatpush1.msra.mxu0 0.0
  %614 = vmatprep.subr.mxu0 0.0
  %615 = vmatpush1.msra.mxu0 0.0
  %616 = vmatprep.subr.mxu0 0.0
  %617 = vmatpush1.msra.mxu0 0.0
  %618 = vmatprep.subr.mxu0 0.0
  %619 = vmatpush1.msra.mxu0 0.0
  %620 = vmatprep.subr.mxu0 0.0
  %621 = vmatpush1.msra.mxu0 0.0
  %622 = vmatprep.mubr.f32.mxu0 0.0
  %623 = vmatmul.mubr.f32.gmra.mrb[0].mxu0 %v436
  %v624 = vpop.f32.mrb[0].mxu0
  %v625 = vadd.f32 0.0, %v624
  %v626 = vpop.f32.mrb[0].mxu0
  %627 = vmatprep.mubr.f32.mxu0 0.0
  %628 = vmatmul.mubr.f32.gmra.mrb[0].mxu0 %v437
  %v629 = vpop.f32.mrb[0].mxu0
  %v630 = vadd.f32 0.0, %v629
  %v631 = vpop.f32.mrb[0].mxu0
  %632 = vmatprep.mubr.f32.mxu0 0.0
  %633 = vmatmul.mubr.f32.gmra.mrb[0].mxu0 %v438
  %v634 = vpop.f32.mrb[0].mxu0
  %v635 = vadd.f32 0.0, %v634
  %v636 = vpop.f32.mrb[0].mxu0
  %637 = vmatprep.mubr.f32.mxu0 0.0
  %638 = vmatmul.mubr.f32.gmra.mrb[0].mxu0 %v439
  %v639 = vpop.f32.mrb[0].mxu0
  %v640 = vadd.f32 0.0, %v639
  %v641 = vpop.f32.mrb[0].mxu0
  %642 = vdwg.mxu0
  %s643 = scalar_lea.vmem %s5, 256
  %v644 = vld [vmem:[%s643] sm:$0xff]
  %v645 = vld [vmem:[%s643 + $0x8] sm:$0xff]
  %v646 = vld [vmem:[%s643 + $0x10] sm:$0xff]
  %v647 = vld [vmem:[%s643 + $0x18] sm:$0xff]
  %v648 = vld [vmem:[%s643 + $0x20] sm:$0xff]
  %v649 = vld [vmem:[%s643 + $0x28] sm:$0xff]
  %v650 = vld [vmem:[%s643 + $0x30] sm:$0xff]
  %v651 = vld [vmem:[%s643 + $0x38] sm:$0xff]
  %v652 = vld [vmem:[%s643 + $0x40] sm:$0xff]
  %v653 = vld [vmem:[%s643 + $0x48] sm:$0xff]
  %v654 = vld [vmem:[%s643 + $0x50] sm:$0xff]
  %v655 = vld [vmem:[%s643 + $0x58] sm:$0xff]
  %v656 = vld [vmem:[%s643 + $0x60] sm:$0xff]
  %v657 = vld [vmem:[%s643 + $0x68] sm:$0xff]
  %v658 = vld [vmem:[%s643 + $0x70] sm:$0xff]
  %v659 = vld [vmem:[%s643 + $0x78] sm:$0xff]
  %660 = vmatprep.subr.mxu0 0.0
  %661 = vmatpush1.msra.mxu0 %v644
  %662 = vmatprep.subr.mxu0 0.0
  %663 = vmatpush1.msra.mxu0 %v645
  %664 = vmatprep.subr.mxu0 0.0
  %665 = vmatpush1.msra.mxu0 %v646
  %666 = vmatprep.subr.mxu0 0.0
  %667 = vmatpush1.msra.mxu0 %v647
  %668 = vmatprep.subr.mxu0 0.0
  %669 = vmatpush1.msra.mxu0 %v648
  %670 = vmatprep.subr.mxu0 0.0
  %671 = vmatpush1.msra.mxu0 %v649
  %672 = vmatprep.subr.mxu0 0.0
  %673 = vmatpush1.msra.mxu0 %v650
  %674 = vmatprep.subr.mxu0 0.0
  %675 = vmatpush1.msra.mxu0 %v651
  %676 = vmatprep.subr.mxu0 0.0
  %677 = vmatpush1.msra.mxu0 %v652
  %678 = vmatprep.subr.mxu0 0.0
  %679 = vmatpush1.msra.mxu0 %v653
  %680 = vmatprep.subr.mxu0 0.0
  %681 = vmatpush1.msra.mxu0 %v654
  %682 = vmatprep.subr.mxu0 0.0
  %683 = vmatpush1.msra.mxu0 %v655
  %684 = vmatprep.subr.mxu0 0.0
  %685 = vmatpush1.msra.mxu0 %v656
  %686 = vmatprep.subr.mxu0 0.0
  %687 = vmatpush1.msra.mxu0 %v657
  %688 = vmatprep.subr.mxu0 0.0
  %689 = vmatpush1.msra.mxu0 %v658
  %690 = vmatprep.subr.mxu0 0.0
  %691 = vmatpush1.msra.mxu0 %v659
  %692 = vmatprep.subr.mxu0 0.0
  %693 = vmatpush1.msra.mxu0 0.0
  %694 = vmatprep.subr.mxu0 0.0
  %695 = vmatpush1.msra.mxu0 0.0
  %696 = vmatprep.subr.mxu0 0.0
  %697 = vmatpush1.msra.mxu0 0.0
  %698 = vmatprep.subr.mxu0 0.0
  %699 = vmatpush1.msra.mxu0 0.0
  %700 = vmatprep.subr.mxu0 0.0
  %701 = vmatpush1.msra.mxu0 0.0
  %702 = vmatprep.subr.mxu0 0.0
  %703 = vmatpush1.msra.mxu0 0.0
  %704 = vmatprep.subr.mxu0 0.0
  %705 = vmatpush1.msra.mxu0 0.0
  %706 = vmatprep.subr.mxu0 0.0
  %707 = vmatpush1.msra.mxu0 0.0
  %708 = vmatprep.subr.mxu0 0.0
  %709 = vmatpush1.msra.mxu0 0.0
  %710 = vmatprep.subr.mxu0 0.0
  %711 = vmatpush1.msra.mxu0 0.0
  %712 = vmatprep.subr.mxu0 0.0
  %713 = vmatpush1.msra.mxu0 0.0
  %714 = vmatprep.subr.mxu0 0.0
  %715 = vmatpush1.msra.mxu0 0.0
  %716 = vmatprep.subr.mxu0 0.0
  %717 = vmatpush1.msra.mxu0 0.0
  %718 = vmatprep.subr.mxu0 0.0
  %719 = vmatpush1.msra.mxu0 0.0
  %720 = vmatprep.subr.mxu0 0.0
  %721 = vmatpush1.msra.mxu0 0.0
  %722 = vmatprep.subr.mxu0 0.0
  %723 = vmatpush1.msra.mxu0 0.0
  %724 = vmatprep.mubr.f32.mxu0 0.0
  %725 = vmatmul.mubr.f32.gmra.mrb[0].mxu0 %v436
  %v726 = vpop.f32.mrb[0].mxu0
  %v727 = vadd.f32 0.0, %v726
  %v728 = vpop.f32.mrb[0].mxu0
  %729 = vmatprep.mubr.f32.mxu0 0.0
  %730 = vmatmul.mubr.f32.gmra.mrb[0].mxu0 %v437
  %v731 = vpop.f32.mrb[0].mxu0
  %v732 = vadd.f32 0.0, %v731
  %v733 = vpop.f32.mrb[0].mxu0
  %734 = vmatprep.mubr.f32.mxu0 0.0
  %735 = vmatmul.mubr.f32.gmra.mrb[0].mxu0 %v438
  %v736 = vpop.f32.mrb[0].mxu0
  %v737 = vadd.f32 0.0, %v736
  %v738 = vpop.f32.mrb[0].mxu0
  %739 = vmatprep.mubr.f32.mxu0 0.0
  %740 = vmatmul.mubr.f32.gmra.mrb[0].mxu0 %v439
  %v741 = vpop.f32.mrb[0].mxu0
  %v742 = vadd.f32 0.0, %v741
  %v743 = vpop.f32.mrb[0].mxu0
  %744 = vdwg.mxu0
  %v745 = vrot.slane %v523, 7
  %v746 = vrot.slane %v528, 7
  %v747 = vrot.slane %v533, 7
  %v748 = vrot.slane %v538, 7
  %v749 = vsel %vm338, %v747, %v748
  %v750 = vsel %vm338, %v746, %v747
  %v751 = vsel %vm338, %v745, %v746
  %v752 = vsel %vm338, %v748, %v745
  %v753 = vmul.f32 %v752, %v346
  %v754 = vmul.f32 %v751, %v351
  %v755 = vmul.f32 %v750, %v356
  %v756 = vmul.f32 %v749, %v361
  %v757 = vadd.f32 %v753, %v625
  %v758 = vadd.f32 %v754, %v630
  %v759 = vadd.f32 %v755, %v635
  %v760 = vadd.f32 %v756, %v640
  %v761 = vrot.slane %v727, 1
  %v762 = vrot.slane %v732, 1
  %v763 = vrot.slane %v737, 1
  %v764 = vrot.slane %v742, 1
  %v765 = vsel %vm375, %v763, %v764
  %v766 = vsel %vm375, %v762, %v763
  %v767 = vsel %vm375, %v761, %v762
  %v768 = vsel %vm375, %v764, %v761
  %v769 = vmul.f32 %v767, %v383
  %v770 = vmul.f32 %v766, %v388
  %v771 = vmul.f32 %v765, %v393
  %v772 = vmul.f32 %v768, %v398
  %v773 = vadd.f32 %v757, %v769
  %v774 = vadd.f32 %v758, %v770
  %v775 = vadd.f32 %v759, %v771
  %v776 = vadd.f32 %v760, %v772
  %v777 = vld [vmem:[%s6] sm:$0x1]
  %v779 = vlaneseq
  %v780 = vshrl.u32 %v779, 7
  %v781 = vsub.s32 0, %v780
  %v782 = vrot.slane %v777, %v781
  %v784 = vadd.f32 %v773, %v782
  %v785 = vadd.f32 %v774, %v782
  %v786 = vadd.f32 %v775, %v782
  %v787 = vadd.f32 %v776, %v782
  %v788 = vmul.f32 %v784, 0.5
  %v789 = vmul.f32 %v785, 0.5
  %v790 = vmul.f32 %v786, 0.5
  %v791 = vmul.f32 %v787, 0.5
  %v792 = vmul.f32 %v784, %v423
  %v793 = vmul.f32 %v785, %v423
  %v794 = vmul.f32 %v786, %v423
  %v795 = vmul.f32 %v787, %v423
  %v796 = verf.f32.pop %v792
  %v797 = verf.f32.pop %v793
  %v798 = verf.f32.pop %v794
  %v799 = verf.f32.pop %v795
  %v800 = vadd.f32 %v796, 1.0
  %v801 = vadd.f32 %v797, 1.0
  %v802 = vadd.f32 %v798, 1.0
  %v803 = vadd.f32 %v799, 1.0
  %v804 = vmul.f32 %v788, %v800
  %v805 = vmul.f32 %v789, %v801
  %v806 = vmul.f32 %v790, %v802
  %v807 = vmul.f32 %v791, %v803
  %808 = vst [vmem:[%s7] sm:$0xff] %v804
  %809 = vst [vmem:[%s7 + $0x8] sm:$0xff] %v805
  %810 = vst [vmem:[%s7 + $0x10] sm:$0xff] %v806
  %811 = vst [vmem:[%s7 + $0x18] sm:$0xff] %v807
  // Predicated region
  $region30: #{double_conv_forward.1} parent=0 // pred_check
    _
  $region31: #{double_conv_forward.1} parent=0 // pred_check_branch
    %813 = sbr.rel (0) target = $region33
  $region32: #{double_conv_forward.1} parent=0 // pred_region
    _
  $region33: #{double_conv_forward.1} parent=0 // pred_fallthru
    _
  // Predicated region
  $region34: #{double_conv_forward.1} parent=0 // pred_check
    _
  $region35: #{double_conv_forward.1} parent=0 // pred_check_branch
    %815 = sbr.rel (0) target = $region37
  $region36: #{double_conv_forward.1} parent=0 // pred_region
    _
  $region37: #{double_conv_forward.1} parent=0 // pred_fallthru
    _

</llo_original>
